<compile_context>
chip_gen: v7x
topology: tpu7x:2x2x1
jax: 0.10.0
libtpu: 0.0.40
codegen_flags: <defaults>
</compile_context>

<pallas_src>
import jax
import jax.numpy as jnp
from jax.experimental import pallas as pl
from jax.experimental.pallas import tpu as pltpu

EPS = 1e-5
# tap t = ky*3 + kx  <->  spatial offset (oy, ox) = (ky-1, kx-1)
TAPS = tuple((dy - 1, dx - 1) for dy in range(3) for dx in range(3))


# ----------------------------------------------------------------------------
# Fused Basic_block kernel:
#   (cconv1 + BN + ReLU + residual) -> (cconv2 + BN + ReLU), all in VMEM.
# ----------------------------------------------------------------------------
def _make_basic_block_kernel(W, C, L):
    """W = image width, C = channels per complex part, L = lanes per step."""

    def kernel(xy_ref, m_ref, w1_ref, s1_ref, w2_ref, s2_ref, or_ref, oi_ref):
        xy = xy_ref[...]                       # (2C, L) f32
        m = m_ref[...]                         # (9, L)  f32 {0,1}, host-precomputed

        def make_patches(a):
            """(2C, L) f32 -> (18C, L) bf16 stack of the 9 shifted+masked taps."""
            taps = []
            for t, (oy, ox) in enumerate(TAPS):
                off = oy * W + ox
                r = a if off == 0 else pltpu.roll(a, (-off) % L, axis=1)
                if off != 0:
                    # zero padding + isolation between lane-packed images
                    r = r * m[t]
                taps.append(r.astype(jnp.bfloat16))
            return jnp.concatenate(taps, axis=0)

        # ---- layer 1: complex conv (1 MXU matmul) + folded BN + ReLU + residual
        acc1 = jnp.dot(w1_ref[...], make_patches(xy),
                       preferred_element_type=jnp.float32)       # (2C, L)
        y = jnp.maximum(acc1 + s1_ref[...], 0.0) + xy             # residual in f32

        # ---- layer 2: complex conv (1 MXU matmul) + folded BN + ReLU
        acc2 = jnp.dot(w2_ref[...], make_patches(y),
                       preferred_element_type=jnp.float32)       # (2C, L)
        out = jnp.maximum(acc2 + s2_ref[...], 0.0)
        or_ref[...] = out[:C]
        oi_ref[...] = out[C:]

    return kernel


# ----------------------------------------------------------------------------
# Host-side helpers
# ----------------------------------------------------------------------------
def _boundary_masks(H, W, nb):
    """{0,1} f32 validity mask per tap, per lane (lane = image-local position)."""
    HW = H * W
    pos = jnp.arange(nb * HW, dtype=jnp.int32) % HW
    row = pos // W
    col = pos % W
    rows = []
    for oy, ox in TAPS:
        mk = jnp.ones((nb * HW,), dtype=bool)
        if oy == -1:
            mk = mk & (row >= 1)
        if oy == 1:
            mk = mk & (row <= H - 2)
        if ox == -1:
            mk = mk & (col >= 1)
        if ox == 1:
            mk = mk & (col <= W - 2)
        rows.append(mk)
    return jnp.stack(rows).astype(jnp.float32)          # (9, nb*HW)


def _fold_layer(p):
    """Build the (2*Cout, 18*Cin) bf16 block weight and (2*Cout, 1) f32 shift.

    Folds the complex-conv block structure [[wr,-wi],[wi,wr]], the conv biases
    and the eval-mode BatchNorm (running stats) into one weight + shift."""
    Cin, Cout = p["w_r"].shape[1], p["w_r"].shape[2]
    scale_r = p["gamma_r"] / jnp.sqrt(p["var_r"] + EPS)
    shift_r = (p["b_r"] - p["b_i"] - p["mean_r"]) * scale_r + p["beta_r"]
    scale_i = p["gamma_i"] / jnp.sqrt(p["var_i"] + EPS)
    shift_i = (p["b_i"] + p["b_r"] - p["mean_i"]) * scale_i + p["beta_i"]

    wr = p["w_r"]                                        # (9, Cin, Cout)
    wi = p["w_i"]
    top = jnp.concatenate([wr, -wi], axis=1) * scale_r   # real out
    bot = jnp.concatenate([wi, wr], axis=1) * scale_i    # imag out
    wbig = jnp.concatenate([top, bot], axis=2)           # (9, 2Cin, 2Cout)
    wbig = wbig.reshape(9 * 2 * Cin, 2 * Cout).T         # (2Cout, 18Cin)

    shift = jnp.concatenate([shift_r, shift_i]).reshape(2 * Cout, 1)
    return wbig.astype(jnp.bfloat16), shift.astype(jnp.float32)


def _images_per_step(N, H, W, C):
    """Images packed onto the lane axis per grid step.

    Pack as many as a conservative VMEM working-set budget allows; prefer >= 2
    grid steps (v7x has two TensorCores) when that still leaves >= 1024 lanes
    per step. When a step covers only part of the batch, its lane count must be
    a multiple of 128 (BlockSpec constraint)."""
    HW = H * W
    # per-lane bytes: one live bf16 patch stack + f32 xy/y/acc/out + masks
    per_lane = 18 * C * 2 + 4 * (2 * C) * 4 + 9 * 4
    cap = max(1, (16 << 20) // (per_lane * HW))
    divs = [d for d in range(1, N + 1) if N % d == 0]
    ok = [d for d in divs if d <= cap and (N // d == 1 or (d * HW) % 128 == 0)]
    nb = max(ok) if ok else 1
    if N // nb == 1:
        alt = [d for d in divs if d < nb and d * HW >= 1024 and (d * HW) % 128 == 0]
        if alt:
            nb = max(alt)   # give v7x's second TensorCore work, still fat steps
    return nb


# ----------------------------------------------------------------------------
# Wrapper: Basic_block.forward on NCHW inputs
# ----------------------------------------------------------------------------
def basic_block(x_r, x_i, p1, p2):
    N, C, H, W = x_r.shape
    Cout = p1["w_r"].shape[2]
    assert Cout == C, "Basic_block residual add requires num_in == num_out"
    HW = H * W

    nb = _images_per_step(N, H, W, C)
    G = N // nb
    L = nb * HW

    # channels on sublanes, (image, spatial) packed lane-dense on lanes
    xy = jnp.concatenate([x_r, x_i], axis=1).reshape(N, 2 * C, HW)
    xy = xy.transpose(1, 0, 2).reshape(2 * C, N * HW)

    mask9 = _boundary_masks(H, W, nb)
    w1, s1 = _fold_layer(p1)
    w2, s2 = _fold_layer(p2)

    kernel = _make_basic_block_kernel(W, C, L)
    out_r, out_i = pl.pallas_call(
        kernel,
        grid=(G,),
        in_specs=[
            pl.BlockSpec((2 * C, L), lambda g: (0, g)),
            pl.BlockSpec(mask9.shape, lambda g: (0, 0)),
            pl.BlockSpec(w1.shape, lambda g: (0, 0)),
            pl.BlockSpec(s1.shape, lambda g: (0, 0)),
            pl.BlockSpec(w2.shape, lambda g: (0, 0)),
            pl.BlockSpec(s2.shape, lambda g: (0, 0)),
        ],
        out_specs=[
            pl.BlockSpec((C, L), lambda g: (0, g)),
            pl.BlockSpec((C, L), lambda g: (0, g)),
        ],
        out_shape=[
            jax.ShapeDtypeStruct((C, N * HW), jnp.float32),
            jax.ShapeDtypeStruct((C, N * HW), jnp.float32),
        ],
        compiler_params=pltpu.CompilerParams(
            dimension_semantics=("parallel",)),
    )(xy, mask9, w1, s1, w2, s2)

    out_r = out_r.reshape(C, N, H, W).transpose(1, 0, 2, 3)
    out_i = out_i.reshape(C, N, H, W).transpose(1, 0, 2, 3)
    return out_r, out_i


# ----------------------------------------------------------------------------
# Deterministic parameter initialization (same tensor shapes as the nn.Module)
# ----------------------------------------------------------------------------
def init_cconv_params(key, cin, cout):
    ks = jax.random.split(key, 12)
    bound = 1.0 / (cin * 9) ** 0.5
    u = lambda k, s: jax.random.uniform(k, s, jnp.float32, -bound, bound)
    return dict(
        w_r=u(ks[0], (3, 3, cin, cout)).reshape(9, cin, cout),
        w_i=u(ks[1], (3, 3, cin, cout)).reshape(9, cin, cout),
        b_r=u(ks[2], (cout,)),
        b_i=u(ks[3], (cout,)),
        gamma_r=1.0 + 0.1 * jax.random.normal(ks[4], (cout,), jnp.float32),
        beta_r=0.1 * jax.random.normal(ks[5], (cout,), jnp.float32),
        mean_r=0.1 * jax.random.normal(ks[6], (cout,), jnp.float32),
        var_r=1.0 + 0.2 * jax.random.uniform(ks[7], (cout,), jnp.float32),
        gamma_i=1.0 + 0.1 * jax.random.normal(ks[8], (cout,), jnp.float32),
        beta_i=0.1 * jax.random.normal(ks[9], (cout,), jnp.float32),
        mean_i=0.1 * jax.random.normal(ks[10], (cout,), jnp.float32),
        var_i=1.0 + 0.2 * jax.random.uniform(ks[11], (cout,), jnp.float32),
    )


# ----------------------------------------------------------------------------
# Pure-JAX reference (mirrors the PyTorch forward, NCHW) for correctness check
# ----------------------------------------------------------------------------
def _ref_conv(x, w_hwio, b):
    y = jax.lax.conv_general_dilated(
        x, w_hwio, window_strides=(1, 1), padding=((1, 1), (1, 1)),
        dimension_numbers=("NCHW", "HWIO", "NCHW"))
    return y + b.reshape(1, -1, 1, 1)


def _ref_bn(x, gamma, beta, mean, var):
    rs = lambda v: v.reshape(1, -1, 1, 1)
    return (x - rs(mean)) / jnp.sqrt(rs(var) + EPS) * rs(gamma) + rs(beta)


def ref_cconv_bn_relu(x_r, x_i, p, add_residual=False):
    cin, cout = p["w_r"].shape[1], p["w_r"].shape[2]
    w_r = p["w_r"].reshape(3, 3, cin, cout)
    w_i = p["w_i"].reshape(3, 3, cin, cout)
    x_rr = _ref_conv(x_r, w_r, p["b_r"])
    x_ri = _ref_conv(x_r, w_i, p["b_i"])
    x_ir = _ref_conv(x_i, w_r, p["b_r"])
    x_ii = _ref_conv(x_i, w_i, p["b_i"])
    cr = _ref_bn(x_rr - x_ii, p["gamma_r"], p["beta_r"], p["mean_r"], p["var_r"])
    ci = _ref_bn(x_ri + x_ir, p["gamma_i"], p["beta_i"], p["mean_i"], p["var_i"])
    cr = jax.nn.relu(cr)
    ci = jax.nn.relu(ci)
    if add_residual:
        cr = cr + x_r
        ci = ci + x_i
    return cr, ci


def ref_basic_block(x_r, x_i, p1, p2):
    y_r, y_i = ref_cconv_bn_relu(x_r, x_i, p1, add_residual=True)
    return ref_cconv_bn_relu(y_r, y_i, p2, add_residual=False)


# ----------------------------------------------------------------------------
if __name__ == "__main__":
    key = jax.random.PRNGKey(0)
    N, C, H, W = 2, 4, 16, 16   # num_in == num_out (required by the residual add)

    kx, kp1, kp2 = jax.random.split(key, 3)
    kxr, kxi = jax.random.split(kx)
    x_r = jax.random.normal(kxr, (N, C, H, W), jnp.float32)
    x_i = jax.random.normal(kxi, (N, C, H, W), jnp.float32)

    p1 = init_cconv_params(kp1, C, C)
    p2 = init_cconv_params(kp2, C, C)

    out_r, out_i = basic_block(x_r, x_i, p1, p2)
    jax.block_until_ready((out_r, out_i))

    ref_r, ref_i = ref_basic_block(x_r, x_i, p1, p2)
    assert out_r.shape == (N, C, H, W) and out_i.shape == (N, C, H, W)
    # Tolerance accounts for bf16 MXU operands (f32 accumulation) over 2 layers.
    assert jnp.allclose(out_r, ref_r, rtol=2e-2, atol=5e-2), "real part mismatch"
    assert jnp.allclose(out_i, ref_i, rtol=2e-2, atol=5e-2), "imag part mismatch"

    print("KERNEL_OK")
</pallas_src>

<mosaic_0001>
module attributes {stable_mosaic.version = 11 : i64} {
  func.func @kernel(%arg0: i32, %arg1: memref<8x512xf32, #tpu.memory_space<vmem>>, %arg2: memref<9x512xf32, #tpu.memory_space<vmem>>, %arg3: memref<8x72xbf16, #tpu.memory_space<vmem>>, %arg4: memref<8x1xf32, #tpu.memory_space<vmem>>, %arg5: memref<8x72xbf16, #tpu.memory_space<vmem>>, %arg6: memref<8x1xf32, #tpu.memory_space<vmem>>, %arg7: memref<4x512xf32, #tpu.memory_space<vmem>>, %arg8: memref<4x512xf32, #tpu.memory_space<vmem>>) attributes {dimension_semantics = [#tpu.dimension_semantics<parallel>], iteration_bounds = array<i64: 1>, scalar_prefetch = 0 : i64, scratch_operands = 0 : i64, tpu.core_type = #tpu.core_type<tc>, window_params = [{transform_indices = @transform_0, window_bounds = array<i64: 8, 512>}, {pipeline_mode = #tpu.pipeline_mode<synchronous>, transform_indices = @transform_1, window_bounds = array<i64: 9, 512>}, {pipeline_mode = #tpu.pipeline_mode<synchronous>, transform_indices = @transform_2, window_bounds = array<i64: 8, 72>}, {pipeline_mode = #tpu.pipeline_mode<synchronous>, transform_indices = @transform_3, window_bounds = array<i64: 8, 1>}, {pipeline_mode = #tpu.pipeline_mode<synchronous>, transform_indices = @transform_4, window_bounds = array<i64: 8, 72>}, {pipeline_mode = #tpu.pipeline_mode<synchronous>, transform_indices = @transform_5, window_bounds = array<i64: 8, 1>}, {transform_indices = @transform_6, window_bounds = array<i64: 4, 512>}, {transform_indices = @transform_7, window_bounds = array<i64: 4, 512>}]} {
    %c0 = arith.constant 0 : index
    %c0_0 = arith.constant 0 : index
    %0 = vector.load %arg1[%c0, %c0_0] : memref<8x512xf32, #tpu.memory_space<vmem>>, vector<8x512xf32>
    %c0_1 = arith.constant 0 : index
    %c0_2 = arith.constant 0 : index
    %1 = vector.load %arg2[%c0_1, %c0_2] : memref<9x512xf32, #tpu.memory_space<vmem>>, vector<9x512xf32>
    %c0_3 = arith.constant 0 : index
    %c0_4 = arith.constant 0 : index
    %2 = vector.load %arg3[%c0_3, %c0_4] : memref<8x72xbf16, #tpu.memory_space<vmem>>, vector<8x72xbf16>
    %c17_i32 = arith.constant 17 : i32
    %3 = tpu.dynamic_rotate %0 by %c17_i32 dim 1 : vector<8x512xf32>, i32 -> vector<8x512xf32>
    %4 = vector.extract_strided_slice %1 {offsets = [0, 0], sizes = [1, 512], strides = [1, 1]} : vector<9x512xf32> to vector<1x512xf32>
    %5 = vector.shape_cast %4 : vector<1x512xf32> to vector<512xf32>
    %6 = vector.shape_cast %5 : vector<512xf32> to vector<1x512xf32>
    %7 = vector.broadcast %6 : vector<1x512xf32> to vector<8x512xf32>
    %8 = arith.mulf %3, %7 : vector<8x512xf32>
    %9 = arith.truncf %8 : vector<8x512xf32> to vector<8x512xbf16>
    %c16_i32 = arith.constant 16 : i32
    %10 = tpu.dynamic_rotate %0 by %c16_i32 dim 1 : vector<8x512xf32>, i32 -> vector<8x512xf32>
    %11 = vector.extract_strided_slice %1 {offsets = [1, 0], sizes = [1, 512], strides = [1, 1]} : vector<9x512xf32> to vector<1x512xf32>
    %12 = vector.shape_cast %11 : vector<1x512xf32> to vector<512xf32>
    %13 = vector.shape_cast %12 : vector<512xf32> to vector<1x512xf32>
    %14 = vector.broadcast %13 : vector<1x512xf32> to vector<8x512xf32>
    %15 = arith.mulf %10, %14 : vector<8x512xf32>
    %16 = arith.truncf %15 : vector<8x512xf32> to vector<8x512xbf16>
    %c15_i32 = arith.constant 15 : i32
    %17 = tpu.dynamic_rotate %0 by %c15_i32 dim 1 : vector<8x512xf32>, i32 -> vector<8x512xf32>
    %18 = vector.extract_strided_slice %1 {offsets = [2, 0], sizes = [1, 512], strides = [1, 1]} : vector<9x512xf32> to vector<1x512xf32>
    %19 = vector.shape_cast %18 : vector<1x512xf32> to vector<512xf32>
    %20 = vector.shape_cast %19 : vector<512xf32> to vector<1x512xf32>
    %21 = vector.broadcast %20 : vector<1x512xf32> to vector<8x512xf32>
    %22 = arith.mulf %17, %21 : vector<8x512xf32>
    %23 = arith.truncf %22 : vector<8x512xf32> to vector<8x512xbf16>
    %c1_i32 = arith.constant 1 : i32
    %24 = tpu.dynamic_rotate %0 by %c1_i32 dim 1 : vector<8x512xf32>, i32 -> vector<8x512xf32>
    %25 = vector.extract_strided_slice %1 {offsets = [3, 0], sizes = [1, 512], strides = [1, 1]} : vector<9x512xf32> to vector<1x512xf32>
    %26 = vector.shape_cast %25 : vector<1x512xf32> to vector<512xf32>
    %27 = vector.shape_cast %26 : vector<512xf32> to vector<1x512xf32>
    %28 = vector.broadcast %27 : vector<1x512xf32> to vector<8x512xf32>
    %29 = arith.mulf %24, %28 : vector<8x512xf32>
    %30 = arith.truncf %29 : vector<8x512xf32> to vector<8x512xbf16>
    %31 = arith.truncf %0 : vector<8x512xf32> to vector<8x512xbf16>
    %c511_i32 = arith.constant 511 : i32
    %32 = tpu.dynamic_rotate %0 by %c511_i32 dim 1 : vector<8x512xf32>, i32 -> vector<8x512xf32>
    %33 = vector.extract_strided_slice %1 {offsets = [5, 0], sizes = [1, 512], strides = [1, 1]} : vector<9x512xf32> to vector<1x512xf32>
    %34 = vector.shape_cast %33 : vector<1x512xf32> to vector<512xf32>
    %35 = vector.shape_cast %34 : vector<512xf32> to vector<1x512xf32>
    %36 = vector.broadcast %35 : vector<1x512xf32> to vector<8x512xf32>
    %37 = arith.mulf %32, %36 : vector<8x512xf32>
    %38 = arith.truncf %37 : vector<8x512xf32> to vector<8x512xbf16>
    %c497_i32 = arith.constant 497 : i32
    %39 = tpu.dynamic_rotate %0 by %c497_i32 dim 1 : vector<8x512xf32>, i32 -> vector<8x512xf32>
    %40 = vector.extract_strided_slice %1 {offsets = [6, 0], sizes = [1, 512], strides = [1, 1]} : vector<9x512xf32> to vector<1x512xf32>
    %41 = vector.shape_cast %40 : vector<1x512xf32> to vector<512xf32>
    %42 = vector.shape_cast %41 : vector<512xf32> to vector<1x512xf32>
    %43 = vector.broadcast %42 : vector<1x512xf32> to vector<8x512xf32>
    %44 = arith.mulf %39, %43 : vector<8x512xf32>
    %45 = arith.truncf %44 : vector<8x512xf32> to vector<8x512xbf16>
    %c496_i32 = arith.constant 496 : i32
    %46 = tpu.dynamic_rotate %0 by %c496_i32 dim 1 : vector<8x512xf32>, i32 -> vector<8x512xf32>
    %47 = vector.extract_strided_slice %1 {offsets = [7, 0], sizes = [1, 512], strides = [1, 1]} : vector<9x512xf32> to vector<1x512xf32>
    %48 = vector.shape_cast %47 : vector<1x512xf32> to vector<512xf32>
    %49 = vector.shape_cast %48 : vector<512xf32> to vector<1x512xf32>
    %50 = vector.broadcast %49 : vector<1x512xf32> to vector<8x512xf32>
    %51 = arith.mulf %46, %50 : vector<8x512xf32>
    %52 = arith.truncf %51 : vector<8x512xf32> to vector<8x512xbf16>
    %c495_i32 = arith.constant 495 : i32
    %53 = tpu.dynamic_rotate %0 by %c495_i32 dim 1 : vector<8x512xf32>, i32 -> vector<8x512xf32>
    %54 = vector.extract_strided_slice %1 {offsets = [8, 0], sizes = [1, 512], strides = [1, 1]} : vector<9x512xf32> to vector<1x512xf32>
    %55 = vector.shape_cast %54 : vector<1x512xf32> to vector<512xf32>
    %56 = vector.shape_cast %55 : vector<512xf32> to vector<1x512xf32>
    %57 = vector.broadcast %56 : vector<1x512xf32> to vector<8x512xf32>
    %58 = arith.mulf %53, %57 : vector<8x512xf32>
    %59 = arith.truncf %58 : vector<8x512xf32> to vector<8x512xbf16>
    %60 = tpu.concatenate %9, %16, %23, %30, %31, %38, %45, %52, %59 in 0 : vector<8x512xbf16>, vector<8x512xbf16>, vector<8x512xbf16>, vector<8x512xbf16>, vector<8x512xbf16>, vector<8x512xbf16>, vector<8x512xbf16>, vector<8x512xbf16>, vector<8x512xbf16> -> vector<72x512xbf16>
    %cst = arith.constant dense<0.000000e+00> : vector<8x512xf32>
    %61 = tpu.matmul %2, %60, %cst {dimension_numbers = #tpu.dot_dimension_numbers<[1], [0], [0], [1], [0, 0, 1, 1], [], []>} : vector<8x72xbf16>, vector<72x512xbf16>, vector<8x512xf32> -> vector<8x512xf32>
    %c0_5 = arith.constant 0 : index
    %c0_6 = arith.constant 0 : index
    %62 = vector.load %arg4[%c0_5, %c0_6] : memref<8x1xf32, #tpu.memory_space<vmem>>, vector<8x1xf32>
    %63 = vector.broadcast %62 : vector<8x1xf32> to vector<8x512xf32>
    %64 = arith.addf %61, %63 : vector<8x512xf32>
    %cst_7 = arith.constant 0.000000e+00 : f32
    %65 = vector.broadcast %cst_7 : f32 to vector<8x512xf32>
    %66 = arith.maximumf %64, %65 : vector<8x512xf32>
    %67 = arith.addf %66, %0 : vector<8x512xf32>
    %c0_8 = arith.constant 0 : index
    %c0_9 = arith.constant 0 : index
    %68 = vector.load %arg5[%c0_8, %c0_9] : memref<8x72xbf16, #tpu.memory_space<vmem>>, vector<8x72xbf16>
    %c17_i32_10 = arith.constant 17 : i32
    %69 = tpu.dynamic_rotate %67 by %c17_i32_10 dim 1 : vector<8x512xf32>, i32 -> vector<8x512xf32>
    %70 = vector.extract_strided_slice %1 {offsets = [0, 0], sizes = [1, 512], strides = [1, 1]} : vector<9x512xf32> to vector<1x512xf32>
    %71 = vector.shape_cast %70 : vector<1x512xf32> to vector<512xf32>
    %72 = vector.shape_cast %71 : vector<512xf32> to vector<1x512xf32>
    %73 = vector.broadcast %72 : vector<1x512xf32> to vector<8x512xf32>
    %74 = arith.mulf %69, %73 : vector<8x512xf32>
    %75 = arith.truncf %74 : vector<8x512xf32> to vector<8x512xbf16>
    %c16_i32_11 = arith.constant 16 : i32
    %76 = tpu.dynamic_rotate %67 by %c16_i32_11 dim 1 : vector<8x512xf32>, i32 -> vector<8x512xf32>
    %77 = vector.extract_strided_slice %1 {offsets = [1, 0], sizes = [1, 512], strides = [1, 1]} : vector<9x512xf32> to vector<1x512xf32>
    %78 = vector.shape_cast %77 : vector<1x512xf32> to vector<512xf32>
    %79 = vector.shape_cast %78 : vector<512xf32> to vector<1x512xf32>
    %80 = vector.broadcast %79 : vector<1x512xf32> to vector<8x512xf32>
    %81 = arith.mulf %76, %80 : vector<8x512xf32>
    %82 = arith.truncf %81 : vector<8x512xf32> to vector<8x512xbf16>
    %c15_i32_12 = arith.constant 15 : i32
    %83 = tpu.dynamic_rotate %67 by %c15_i32_12 dim 1 : vector<8x512xf32>, i32 -> vector<8x512xf32>
    %84 = vector.extract_strided_slice %1 {offsets = [2, 0], sizes = [1, 512], strides = [1, 1]} : vector<9x512xf32> to vector<1x512xf32>
    %85 = vector.shape_cast %84 : vector<1x512xf32> to vector<512xf32>
    %86 = vector.shape_cast %85 : vector<512xf32> to vector<1x512xf32>
    %87 = vector.broadcast %86 : vector<1x512xf32> to vector<8x512xf32>
    %88 = arith.mulf %83, %87 : vector<8x512xf32>
    %89 = arith.truncf %88 : vector<8x512xf32> to vector<8x512xbf16>
    %c1_i32_13 = arith.constant 1 : i32
    %90 = tpu.dynamic_rotate %67 by %c1_i32_13 dim 1 : vector<8x512xf32>, i32 -> vector<8x512xf32>
    %91 = vector.extract_strided_slice %1 {offsets = [3, 0], sizes = [1, 512], strides = [1, 1]} : vector<9x512xf32> to vector<1x512xf32>
    %92 = vector.shape_cast %91 : vector<1x512xf32> to vector<512xf32>
    %93 = vector.shape_cast %92 : vector<512xf32> to vector<1x512xf32>
    %94 = vector.broadcast %93 : vector<1x512xf32> to vector<8x512xf32>
    %95 = arith.mulf %90, %94 : vector<8x512xf32>
    %96 = arith.truncf %95 : vector<8x512xf32> to vector<8x512xbf16>
    %97 = arith.truncf %67 : vector<8x512xf32> to vector<8x512xbf16>
    %c511_i32_14 = arith.constant 511 : i32
    %98 = tpu.dynamic_rotate %67 by %c511_i32_14 dim 1 : vector<8x512xf32>, i32 -> vector<8x512xf32>
    %99 = vector.extract_strided_slice %1 {offsets = [5, 0], sizes = [1, 512], strides = [1, 1]} : vector<9x512xf32> to vector<1x512xf32>
    %100 = vector.shape_cast %99 : vector<1x512xf32> to vector<512xf32>
    %101 = vector.shape_cast %100 : vector<512xf32> to vector<1x512xf32>
    %102 = vector.broadcast %101 : vector<1x512xf32> to vector<8x512xf32>
    %103 = arith.mulf %98, %102 : vector<8x512xf32>
    %104 = arith.truncf %103 : vector<8x512xf32> to vector<8x512xbf16>
    %c497_i32_15 = arith.constant 497 : i32
    %105 = tpu.dynamic_rotate %67 by %c497_i32_15 dim 1 : vector<8x512xf32>, i32 -> vector<8x512xf32>
    %106 = vector.extract_strided_slice %1 {offsets = [6, 0], sizes = [1, 512], strides = [1, 1]} : vector<9x512xf32> to vector<1x512xf32>
    %107 = vector.shape_cast %106 : vector<1x512xf32> to vector<512xf32>
    %108 = vector.shape_cast %107 : vector<512xf32> to vector<1x512xf32>
    %109 = vector.broadcast %108 : vector<1x512xf32> to vector<8x512xf32>
    %110 = arith.mulf %105, %109 : vector<8x512xf32>
    %111 = arith.truncf %110 : vector<8x512xf32> to vector<8x512xbf16>
    %c496_i32_16 = arith.constant 496 : i32
    %112 = tpu.dynamic_rotate %67 by %c496_i32_16 dim 1 : vector<8x512xf32>, i32 -> vector<8x512xf32>
    %113 = vector.extract_strided_slice %1 {offsets = [7, 0], sizes = [1, 512], strides = [1, 1]} : vector<9x512xf32> to vector<1x512xf32>
    %114 = vector.shape_cast %113 : vector<1x512xf32> to vector<512xf32>
    %115 = vector.shape_cast %114 : vector<512xf32> to vector<1x512xf32>
    %116 = vector.broadcast %115 : vector<1x512xf32> to vector<8x512xf32>
    %117 = arith.mulf %112, %116 : vector<8x512xf32>
    %118 = arith.truncf %117 : vector<8x512xf32> to vector<8x512xbf16>
    %c495_i32_17 = arith.constant 495 : i32
    %119 = tpu.dynamic_rotate %67 by %c495_i32_17 dim 1 : vector<8x512xf32>, i32 -> vector<8x512xf32>
    %120 = vector.extract_strided_slice %1 {offsets = [8, 0], sizes = [1, 512], strides = [1, 1]} : vector<9x512xf32> to vector<1x512xf32>
    %121 = vector.shape_cast %120 : vector<1x512xf32> to vector<512xf32>
    %122 = vector.shape_cast %121 : vector<512xf32> to vector<1x512xf32>
    %123 = vector.broadcast %122 : vector<1x512xf32> to vector<8x512xf32>
    %124 = arith.mulf %119, %123 : vector<8x512xf32>
    %125 = arith.truncf %124 : vector<8x512xf32> to vector<8x512xbf16>
    %126 = tpu.concatenate %75, %82, %89, %96, %97, %104, %111, %118, %125 in 0 : vector<8x512xbf16>, vector<8x512xbf16>, vector<8x512xbf16>, vector<8x512xbf16>, vector<8x512xbf16>, vector<8x512xbf16>, vector<8x512xbf16>, vector<8x512xbf16>, vector<8x512xbf16> -> vector<72x512xbf16>
    %cst_18 = arith.constant dense<0.000000e+00> : vector<8x512xf32>
    %127 = tpu.matmul %68, %126, %cst_18 {dimension_numbers = #tpu.dot_dimension_numbers<[1], [0], [0], [1], [0, 0, 1, 1], [], []>} : vector<8x72xbf16>, vector<72x512xbf16>, vector<8x512xf32> -> vector<8x512xf32>
    %c0_19 = arith.constant 0 : index
    %c0_20 = arith.constant 0 : index
    %128 = vector.load %arg6[%c0_19, %c0_20] : memref<8x1xf32, #tpu.memory_space<vmem>>, vector<8x1xf32>
    %129 = vector.broadcast %128 : vector<8x1xf32> to vector<8x512xf32>
    %130 = arith.addf %127, %129 : vector<8x512xf32>
    %cst_21 = arith.constant 0.000000e+00 : f32
    %131 = vector.broadcast %cst_21 : f32 to vector<8x512xf32>
    %132 = arith.maximumf %130, %131 : vector<8x512xf32>
    %133 = vector.extract_strided_slice %132 {offsets = [0, 0], sizes = [4, 512], strides = [1, 1]} : vector<8x512xf32> to vector<4x512xf32>
    %c0_22 = arith.constant 0 : index
    %c0_23 = arith.constant 0 : index
    %134 = vector.load %arg7[%c0_22, %c0_23] : memref<4x512xf32, #tpu.memory_space<vmem>>, vector<4x512xf32>
    tpu.vector_store %arg7[%c0_22, %c0_23], %133 {strides = array<i32>} : memref<4x512xf32, #tpu.memory_space<vmem>>, vector<4x512xf32>,
    %135 = vector.extract_strided_slice %132 {offsets = [4, 0], sizes = [4, 512], strides = [1, 1]} : vector<8x512xf32> to vector<4x512xf32>
    %c0_24 = arith.constant 0 : index
    %c0_25 = arith.constant 0 : index
    %136 = vector.load %arg8[%c0_24, %c0_25] : memref<4x512xf32, #tpu.memory_space<vmem>>, vector<4x512xf32>
    tpu.vector_store %arg8[%c0_24, %c0_25], %135 {strides = array<i32>} : memref<4x512xf32, #tpu.memory_space<vmem>>, vector<4x512xf32>,
    return
  }
  func.func @transform_0(%arg0: i32) -> (i32, i32) {
    %c0_i32 = arith.constant 0 : i32
    %c0_i32_0 = arith.constant 0 : i32
    return %c0_i32, %arg0 : i32, i32
  }
  func.func @transform_1(%arg0: i32) -> (i32, i32) {
    %c0_i32 = arith.constant 0 : i32
    %c0_i32_0 = arith.constant 0 : i32
    %c0_i32_1 = arith.constant 0 : i32
    return %c0_i32, %c0_i32_0 : i32, i32
  }
  func.func @transform_2(%arg0: i32) -> (i32, i32) {
    %c0_i32 = arith.constant 0 : i32
    %c0_i32_0 = arith.constant 0 : i32
    %c0_i32_1 = arith.constant 0 : i32
    return %c0_i32, %c0_i32_0 : i32, i32
  }
  func.func @transform_3(%arg0: i32) -> (i32, i32) {
    %c0_i32 = arith.constant 0 : i32
    %c0_i32_0 = arith.constant 0 : i32
    %c0_i32_1 = arith.constant 0 : i32
    return %c0_i32, %c0_i32_0 : i32, i32
  }
  func.func @transform_4(%arg0: i32) -> (i32, i32) {
    %c0_i32 = arith.constant 0 : i32
    %c0_i32_0 = arith.constant 0 : i32
    %c0_i32_1 = arith.constant 0 : i32
    return %c0_i32, %c0_i32_0 : i32, i32
  }
  func.func @transform_5(%arg0: i32) -> (i32, i32) {
    %c0_i32 = arith.constant 0 : i32
    %c0_i32_0 = arith.constant 0 : i32
    %c0_i32_1 = arith.constant 0 : i32
    return %c0_i32, %c0_i32_0 : i32, i32
  }
  func.func @transform_6(%arg0: i32) -> (i32, i32) {
    %c0_i32 = arith.constant 0 : i32
    %c0_i32_0 = arith.constant 0 : i32
    return %c0_i32, %arg0 : i32, i32
  }
  func.func @transform_7(%arg0: i32) -> (i32, i32) {
    %c0_i32 = arith.constant 0 : i32
    %c0_i32_0 = arith.constant 0 : i32
    return %c0_i32, %arg0 : i32, i32
  }
}

</mosaic_0001>

<llo_original>
// kernel: tpu_custom_call.1
$region0: #{tpu_custom_call.1}
  #allocation0 [shape = 'u32[]', space=smem, size = 0x4, offset = 0x4, fixed_abs, tag = 'smem constant byte address 0x4 - core index']
  #allocation1 [shape = 'u32[144,128]{1,0:T(1,128)}', space=vmem, size = 0x12000, scoped, tag = 'internal scratch']
  %s0 = inlined_call_operand.hbm [shape: f32[8,512], index: 0, kind: input, shape index: {}]
  %s1 = inlined_call_operand.hbm [shape: f32[9,512], index: 1, kind: input, shape index: {}]
  %s2 = inlined_call_operand.vmem [shape: bf16[8,72], index: 2, kind: input, shape index: {}]
  %s3 = inlined_call_operand.vmem [shape: f32[8,1], index: 3, kind: input, shape index: {}]
  %s4 = inlined_call_operand.vmem [shape: bf16[8,72], index: 4, kind: input, shape index: {}]
  %s5 = inlined_call_operand.vmem [shape: f32[8,1], index: 5, kind: input, shape index: {}]
  %s6 = inlined_call_operand.hbm [shape: f32[4,512], index: 6, kind: output, shape index: {0}]
  %s7 = inlined_call_operand.hbm [shape: f32[4,512], index: 7, kind: output, shape index: {1}]
  %8 = xla_tuple %s6, %s7
  %s9 = sld [smem:[#allocation0]]
  $region50: #{tpu_custom_call.1} parent=0
    _
  %s11 = ssub.s32 1, %s9
  %s12 = scalar_select 0, %s11, %s9
  $region1: #{tpu_custom_call.1} parent=0
    #allocation2 [shape = 'u8[16384]{0}', space=vmem, size = 0x4000, scoped, tag = 'input window, operand 0, single buffered']
    #allocation3 [shape = 's32[1]{0}', space=sflag, size = 0x4, scoped, tag = 'scoped memory for tpu_custom_call.1']
    #allocation4 [shape = 's32[1]{0}', space=sflag, size = 0x4, scoped, tag = 'scoped memory for tpu_custom_call.1']
    #allocation5 [shape = 'u8[32768]{0}', space=vmem, size = 0x8000, scoped, tag = 'input window, operand 1, single buffered']
    #allocation6 [shape = 's32[1]{0}', space=sflag, size = 0x4, scoped, tag = 'scoped memory for tpu_custom_call.1']
    #allocation7 [shape = 'u8[8192]{0}', space=vmem, size = 0x2000, scoped, tag = 'output window, operand 0, single buffered']
    #allocation8 [shape = 'u8[8192]{0}', space=vmem, size = 0x2000, scoped, tag = 'output window, operand 1, single buffered']
    #allocation9 [shape = 's32[1]{0}', space=sflag, size = 0x4, scoped, tag = 'scoped memory for tpu_custom_call.1']
    %13 = vsyncpa [#allocation3], 0
    %14 = vsyncpa [#allocation6], 0
    %15 = vsyncpa [#allocation4], 0
    %16 = vsyncpa [#allocation9], 0
    // Predicated region
    $region2: #{tpu_custom_call.1} parent=1 // pred_check
      _
    $region3: #{tpu_custom_call.1} parent=1 // pred_check_branch
      %18 = sbr.rel (0) target = $region5
    $region4: #{tpu_custom_call.1} parent=1 // pred_region
      %s20 = ssub.s32 512, 512
      %21 = vsyncadd [#allocation3], %s20
      %s23 = sshll.u32 [#allocation2], 4
      %s24 = int_to_ptr.vmem [resolvable:$true] %s23
      %26 = dma.hbm_to_vmem [thread:$0]  %s0, 512, %s24, [#allocation3]
    $region5: #{tpu_custom_call.1} parent=1 // pred_fallthru
      _
    // Predicated region
    $region6: #{tpu_custom_call.1} parent=1 // pred_check
      _
    $region7: #{tpu_custom_call.1} parent=1 // pred_check_branch
      %28 = sbr.rel (0) target = $region9
    $region8: #{tpu_custom_call.1} parent=1 // pred_region
      %s30 = ssub.s32 1024, 1024
      %31 = vsyncadd [#allocation6], %s30
      %s32 = sshll.u32 [#allocation5], 4
      %s33 = int_to_ptr.vmem [resolvable:$true] %s32
      %38 = dma.hbm_to_vmem [thread:$0]  %s1, 1024, %s33, [#allocation6], 512, 512, 32
    $region9: #{tpu_custom_call.1} parent=1 // pred_fallthru
      _
    // Predicated region
    $region10: #{tpu_custom_call.1} parent=1 // pred_check
      _
    $region11: #{tpu_custom_call.1} parent=1 // pred_check_branch
      %40 = sbr.rel (0) target = $region13
    $region12: #{tpu_custom_call.1} parent=1 // pred_region
      _
    $region13: #{tpu_custom_call.1} parent=1 // pred_fallthru
      _
    // Predicated region
    $region14: #{tpu_custom_call.1} parent=1 // pred_check
      _
    $region15: #{tpu_custom_call.1} parent=1 // pred_check_branch
      %42 = sbr.rel (0) target = $region17
    $region16: #{tpu_custom_call.1} parent=1 // pred_region
      _
    $region17: #{tpu_custom_call.1} parent=1 // pred_fallthru
      _
    // Predicated region
    $region18: #{tpu_custom_call.1} parent=1 // pred_check
      _
    $region19: #{tpu_custom_call.1} parent=1 // pred_check_branch
      %44 = sbr.rel (0) target = $region21
    $region20: #{tpu_custom_call.1} parent=1 // pred_region
      _
    $region21: #{tpu_custom_call.1} parent=1 // pred_fallthru
      _
    // Predicated region
    $region22: #{tpu_custom_call.1} parent=1 // pred_check
      _
    $region23: #{tpu_custom_call.1} parent=1 // pred_check_branch
      %46 = sbr.rel (0) target = $region25
    $region24: #{tpu_custom_call.1} parent=1 // pred_region
      _
    $region25: #{tpu_custom_call.1} parent=1 // pred_fallthru
      _
    // Predicated region
    $region26: #{tpu_custom_call.1} parent=1 // pred_check
      _
    $region27: #{tpu_custom_call.1} parent=1 // pred_check_branch
      %48 = sbr.rel (0) target = $region29
    $region28: #{tpu_custom_call.1} parent=1 // pred_region
      %49 = dma.done [#allocation3], 512
    $region29: #{tpu_custom_call.1} parent=1 // pred_fallthru
      _
    // Predicated region
    $region30: #{tpu_custom_call.1} parent=1 // pred_check
      _
    $region31: #{tpu_custom_call.1} parent=1 // pred_check_branch
      %51 = sbr.rel (0) target = $region33
    $region32: #{tpu_custom_call.1} parent=1 // pred_region
      %52 = dma.done [#allocation6], 1024
    $region33: #{tpu_custom_call.1} parent=1 // pred_fallthru
      _
    %v54 = vld [vmem:[#allocation2] sm:$0xff]
    %v55 = vld [vmem:[#allocation2 + $0x8] sm:$0xff]
    %v56 = vld [vmem:[#allocation2 + $0x10] sm:$0xff]
    %v57 = vld [vmem:[#allocation2 + $0x18] sm:$0xff]
    %v58 = vld [vmem:[#allocation5] sm:$0xff]
    %v59 = vld [vmem:[#allocation5 + $0x8] sm:$0xff]
    %v60 = vld [vmem:[#allocation5 + $0x10] sm:$0xff]
    %v61 = vld [vmem:[#allocation5 + $0x18] sm:$0xff]
    %v62 = vld [vmem:[#allocation5 + $0x20] sm:$0x1]
    %v63 = vld [vmem:[#allocation5 + $0x28] sm:$0x1]
    %v64 = vld [vmem:[#allocation5 + $0x30] sm:$0x1]
    %v65 = vld [vmem:[#allocation5 + $0x38] sm:$0x1]
    %v66 = vld [vmem:[%s2] sm:$0xf]
    %67 = vrot.lane.b32.xlu0 %v54, 17
    %v68 = vpop.permute.xlu0 %67
    %69 = vrot.lane.b32.xlu0 %v55, 17
    %v70 = vpop.permute.xlu0 %69
    %71 = vrot.lane.b32.xlu0 %v56, 17
    %v72 = vpop.permute.xlu0 %71
    %73 = vrot.lane.b32.xlu0 %v57, 17
    %v74 = vpop.permute.xlu0 %73
    %v75 = vlaneseq
    %v76 = vand.u32 %v75, 127
    %vm77 = vcmp.lt.s32.totalorder %v76, 17
    %v78 = vsel %vm77, %v72, %v74
    %v79 = vsel %vm77, %v70, %v72
    %v80 = vsel %vm77, %v68, %v70
    %v81 = vsel %vm77, %v74, %v68
    %v82 = vlaneseq
    %v83 = vshrl.u32 %v82, 7
    %v84 = vsub.s32 0, %v83
    %v85 = vrot.slane %v58, %v84
    %v86 = vlaneseq
    %v87 = vshrl.u32 %v86, 7
    %v88 = vsub.s32 0, %v87
    %v89 = vrot.slane %v59, %v88
    %v90 = vlaneseq
    %v91 = vshrl.u32 %v90, 7
    %v92 = vsub.s32 0, %v91
    %v93 = vrot.slane %v60, %v92
    %v94 = vlaneseq
    %v95 = vshrl.u32 %v94, 7
    %v96 = vsub.s32 0, %v95
    %v97 = vrot.slane %v61, %v96
    %v98 = vmul.f32 %v81, %v85
    %v99 = vmul.f32 %v80, %v89
    %v100 = vmul.f32 %v79, %v93
    %v101 = vmul.f32 %v78, %v97
    %v102 = vpack.c.bf16 %v98, %v98
    %v103 = vpack.c.bf16 %v99, %v99
    %v104 = vpack.c.bf16 %v100, %v100
    %v105 = vpack.c.bf16 %v101, %v101
    %106 = vrot.lane.b32.xlu0 %v54, 16
    %v107 = vpop.permute.xlu0 %106
    %108 = vrot.lane.b32.xlu0 %v55, 16
    %v109 = vpop.permute.xlu0 %108
    %110 = vrot.lane.b32.xlu0 %v56, 16
    %v111 = vpop.permute.xlu0 %110
    %112 = vrot.lane.b32.xlu0 %v57, 16
    %v113 = vpop.permute.xlu0 %112
    %vm114 = vcmp.lt.s32.totalorder %v76, 16
    %v115 = vsel %vm114, %v111, %v113
    %v116 = vsel %vm114, %v109, %v111
    %v117 = vsel %vm114, %v107, %v109
    %v118 = vsel %vm114, %v113, %v107
    %v119 = vlaneseq
    %v120 = vshrl.u32 %v119, 7
    %v121 = vsub.s32 1, %v120
    %v122 = vrot.slane %v58, %v121
    %v123 = vlaneseq
    %v124 = vshrl.u32 %v123, 7
    %v125 = vsub.s32 1, %v124
    %v126 = vrot.slane %v59, %v125
    %v127 = vlaneseq
    %v128 = vshrl.u32 %v127, 7
    %v129 = vsub.s32 1, %v128
    %v130 = vrot.slane %v60, %v129
    %v131 = vlaneseq
    %v132 = vshrl.u32 %v131, 7
    %v133 = vsub.s32 1, %v132
    %v134 = vrot.slane %v61, %v133
    %v135 = vmul.f32 %v118, %v122
    %v136 = vmul.f32 %v117, %v126
    %v137 = vmul.f32 %v116, %v130
    %v138 = vmul.f32 %v115, %v134
    %v139 = vpack.c.bf16 %v135, %v135
    %v140 = vpack.c.bf16 %v136, %v136
    %v141 = vpack.c.bf16 %v137, %v137
    %v142 = vpack.c.bf16 %v138, %v138
    %143 = vrot.lane.b32.xlu0 %v54, 15
    %v144 = vpop.permute.xlu0 %143
    %145 = vrot.lane.b32.xlu0 %v55, 15
    %v146 = vpop.permute.xlu0 %145
    %147 = vrot.lane.b32.xlu0 %v56, 15
    %v148 = vpop.permute.xlu0 %147
    %149 = vrot.lane.b32.xlu0 %v57, 15
    %v150 = vpop.permute.xlu0 %149
    %vm151 = vcmp.lt.s32.totalorder %v76, 15
    %v152 = vsel %vm151, %v148, %v150
    %v153 = vsel %vm151, %v146, %v148
    %v154 = vsel %vm151, %v144, %v146
    %v155 = vsel %vm151, %v150, %v144
    %v156 = vlaneseq
    %v157 = vshrl.u32 %v156, 7
    %v158 = vsub.s32 2, %v157
    %v159 = vrot.slane %v58, %v158
    %v160 = vlaneseq
    %v161 = vshrl.u32 %v160, 7
    %v162 = vsub.s32 2, %v161
    %v163 = vrot.slane %v59, %v162
    %v164 = vlaneseq
    %v165 = vshrl.u32 %v164, 7
    %v166 = vsub.s32 2, %v165
    %v167 = vrot.slane %v60, %v166
    %v168 = vlaneseq
    %v169 = vshrl.u32 %v168, 7
    %v170 = vsub.s32 2, %v169
    %v171 = vrot.slane %v61, %v170
    %v172 = vmul.f32 %v155, %v159
    %v173 = vmul.f32 %v154, %v163
    %v174 = vmul.f32 %v153, %v167
    %v175 = vmul.f32 %v152, %v171
    %v176 = vpack.c.bf16 %v172, %v172
    %v177 = vpack.c.bf16 %v173, %v173
    %v178 = vpack.c.bf16 %v174, %v174
    %v179 = vpack.c.bf16 %v175, %v175
    %180 = vrot.lane.b32.xlu0 %v54, 1
    %v181 = vpop.permute.xlu0 %180
    %182 = vrot.lane.b32.xlu0 %v55, 1
    %v183 = vpop.permute.xlu0 %182
    %184 = vrot.lane.b32.xlu0 %v56, 1
    %v185 = vpop.permute.xlu0 %184
    %186 = vrot.lane.b32.xlu0 %v57, 1
    %v187 = vpop.permute.xlu0 %186
    %vm188 = vcmp.lt.s32.totalorder %v76, 1
    %v189 = vsel %vm188, %v185, %v187
    %v190 = vsel %vm188, %v183, %v185
    %v191 = vsel %vm188, %v181, %v183
    %v192 = vsel %vm188, %v187, %v181
    %v193 = vlaneseq
    %v194 = vshrl.u32 %v193, 7
    %v195 = vsub.s32 3, %v194
    %v196 = vrot.slane %v58, %v195
    %v197 = vlaneseq
    %v198 = vshrl.u32 %v197, 7
    %v199 = vsub.s32 3, %v198
    %v200 = vrot.slane %v59, %v199
    %v201 = vlaneseq
    %v202 = vshrl.u32 %v201, 7
    %v203 = vsub.s32 3, %v202
    %v204 = vrot.slane %v60, %v203
    %v205 = vlaneseq
    %v206 = vshrl.u32 %v205, 7
    %v207 = vsub.s32 3, %v206
    %v208 = vrot.slane %v61, %v207
    %v209 = vmul.f32 %v192, %v196
    %v210 = vmul.f32 %v191, %v200
    %v211 = vmul.f32 %v190, %v204
    %v212 = vmul.f32 %v189, %v208
    %v213 = vpack.c.bf16 %v209, %v209
    %v214 = vpack.c.bf16 %v210, %v210
    %v215 = vpack.c.bf16 %v211, %v211
    %v216 = vpack.c.bf16 %v212, %v212
    %v217 = vpack.c.bf16 %v54, %v54
    %v218 = vpack.c.bf16 %v55, %v55
    %v219 = vpack.c.bf16 %v56, %v56
    %v220 = vpack.c.bf16 %v57, %v57
    %221 = vrot.lane.b32.xlu0 %v54, 127
    %v222 = vpop.permute.xlu0 %221
    %223 = vrot.lane.b32.xlu0 %v55, 127
    %v224 = vpop.permute.xlu0 %223
    %225 = vrot.lane.b32.xlu0 %v56, 127
    %v226 = vpop.permute.xlu0 %225
    %227 = vrot.lane.b32.xlu0 %v57, 127
    %v228 = vpop.permute.xlu0 %227
    %vm229 = vcmp.lt.s32.totalorder %v76, 127
    %v230 = vsel %vm229, %v226, %v228
    %v231 = vsel %vm229, %v224, %v226
    %v232 = vsel %vm229, %v222, %v224
    %v233 = vsel %vm229, %v228, %v222
    %v234 = vlaneseq
    %v235 = vshrl.u32 %v234, 7
    %v236 = vsub.s32 5, %v235
    %v237 = vrot.slane %v58, %v236
    %v238 = vlaneseq
    %v239 = vshrl.u32 %v238, 7
    %v240 = vsub.s32 5, %v239
    %v241 = vrot.slane %v59, %v240
    %v242 = vlaneseq
    %v243 = vshrl.u32 %v242, 7
    %v244 = vsub.s32 5, %v243
    %v245 = vrot.slane %v60, %v244
    %v246 = vlaneseq
    %v247 = vshrl.u32 %v246, 7
    %v248 = vsub.s32 5, %v247
    %v249 = vrot.slane %v61, %v248
    %v250 = vmul.f32 %v232, %v237
    %v251 = vmul.f32 %v231, %v241
    %v252 = vmul.f32 %v230, %v245
    %v253 = vmul.f32 %v233, %v249
    %v254 = vpack.c.bf16 %v250, %v250
    %v255 = vpack.c.bf16 %v251, %v251
    %v256 = vpack.c.bf16 %v252, %v252
    %v257 = vpack.c.bf16 %v253, %v253
    %258 = vrot.lane.b32.xlu0 %v54, 113
    %v259 = vpop.permute.xlu0 %258
    %260 = vrot.lane.b32.xlu0 %v55, 113
    %v261 = vpop.permute.xlu0 %260
    %262 = vrot.lane.b32.xlu0 %v56, 113
    %v263 = vpop.permute.xlu0 %262
    %264 = vrot.lane.b32.xlu0 %v57, 113
    %v265 = vpop.permute.xlu0 %264
    %vm266 = vcmp.lt.s32.totalorder %v76, 113
    %v267 = vsel %vm266, %v263, %v265
    %v268 = vsel %vm266, %v261, %v263
    %v269 = vsel %vm266, %v259, %v261
    %v270 = vsel %vm266, %v265, %v259
    %v271 = vlaneseq
    %v272 = vshrl.u32 %v271, 7
    %v273 = vsub.s32 6, %v272
    %v274 = vrot.slane %v58, %v273
    %v275 = vlaneseq
    %v276 = vshrl.u32 %v275, 7
    %v277 = vsub.s32 6, %v276
    %v278 = vrot.slane %v59, %v277
    %v279 = vlaneseq
    %v280 = vshrl.u32 %v279, 7
    %v281 = vsub.s32 6, %v280
    %v282 = vrot.slane %v60, %v281
    %v283 = vlaneseq
    %v284 = vshrl.u32 %v283, 7
    %v285 = vsub.s32 6, %v284
    %v286 = vrot.slane %v61, %v285
    %v287 = vmul.f32 %v269, %v274
    %v288 = vmul.f32 %v268, %v278
    %v289 = vmul.f32 %v267, %v282
    %v290 = vmul.f32 %v270, %v286
    %v291 = vpack.c.bf16 %v287, %v287
    %v292 = vpack.c.bf16 %v288, %v288
    %v293 = vpack.c.bf16 %v289, %v289
    %v294 = vpack.c.bf16 %v290, %v290
    %295 = vrot.lane.b32.xlu0 %v54, 112
    %v296 = vpop.permute.xlu0 %295
    %297 = vrot.lane.b32.xlu0 %v55, 112
    %v298 = vpop.permute.xlu0 %297
    %299 = vrot.lane.b32.xlu0 %v56, 112
    %v300 = vpop.permute.xlu0 %299
    %301 = vrot.lane.b32.xlu0 %v57, 112
    %v302 = vpop.permute.xlu0 %301
    %vm303 = vcmp.lt.s32.totalorder %v76, 112
    %v304 = vsel %vm303, %v300, %v302
    %v305 = vsel %vm303, %v298, %v300
    %v306 = vsel %vm303, %v296, %v298
    %v307 = vsel %vm303, %v302, %v296
    %v308 = vlaneseq
    %v309 = vshrl.u32 %v308, 7
    %v310 = vsub.s32 7, %v309
    %v311 = vrot.slane %v58, %v310
    %v312 = vlaneseq
    %v313 = vshrl.u32 %v312, 7
    %v314 = vsub.s32 7, %v313
    %v315 = vrot.slane %v59, %v314
    %v316 = vlaneseq
    %v317 = vshrl.u32 %v316, 7
    %v318 = vsub.s32 7, %v317
    %v319 = vrot.slane %v60, %v318
    %v320 = vlaneseq
    %v321 = vshrl.u32 %v320, 7
    %v322 = vsub.s32 7, %v321
    %v323 = vrot.slane %v61, %v322
    %v324 = vmul.f32 %v306, %v311
    %v325 = vmul.f32 %v305, %v315
    %v326 = vmul.f32 %v304, %v319
    %v327 = vmul.f32 %v307, %v323
    %v328 = vpack.c.bf16 %v324, %v324
    %v329 = vpack.c.bf16 %v325, %v325
    %v330 = vpack.c.bf16 %v326, %v326
    %v331 = vpack.c.bf16 %v327, %v327
    %332 = vrot.lane.b32.xlu0 %v54, 111
    %v333 = vpop.permute.xlu0 %332
    %334 = vrot.lane.b32.xlu0 %v55, 111
    %v335 = vpop.permute.xlu0 %334
    %336 = vrot.lane.b32.xlu0 %v56, 111
    %v337 = vpop.permute.xlu0 %336
    %338 = vrot.lane.b32.xlu0 %v57, 111
    %v339 = vpop.permute.xlu0 %338
    %vm340 = vcmp.lt.s32.totalorder %v76, 111
    %v341 = vsel %vm340, %v337, %v339
    %v342 = vsel %vm340, %v335, %v337
    %v343 = vsel %vm340, %v333, %v335
    %v344 = vsel %vm340, %v339, %v333
    %v345 = vlaneseq
    %v346 = vshrl.u32 %v345, 7
    %v347 = vsub.s32 0, %v346
    %v348 = vrot.slane %v62, %v347
    %v349 = vlaneseq
    %v350 = vshrl.u32 %v349, 7
    %v351 = vsub.s32 0, %v350
    %v352 = vrot.slane %v63, %v351
    %v353 = vlaneseq
    %v354 = vshrl.u32 %v353, 7
    %v355 = vsub.s32 0, %v354
    %v356 = vrot.slane %v64, %v355
    %v357 = vlaneseq
    %v358 = vshrl.u32 %v357, 7
    %v359 = vsub.s32 0, %v358
    %v360 = vrot.slane %v65, %v359
    %v361 = vmul.f32 %v343, %v348
    %v362 = vmul.f32 %v342, %v352
    %v363 = vmul.f32 %v341, %v356
    %v364 = vmul.f32 %v344, %v360
    %v365 = vpack.c.bf16 %v361, %v361
    %v366 = vpack.c.bf16 %v362, %v362
    %v367 = vpack.c.bf16 %v363, %v363
    %v368 = vpack.c.bf16 %v364, %v364
    %v373 = vrot.slane %v139, 4
    %v374 = vrot.slane %v140, 4
    %v375 = vrot.slane %v141, 4
    %v376 = vrot.slane %v142, 4
    %v381 = vrot.slane %v213, 4
    %v382 = vrot.slane %v214, 4
    %v383 = vrot.slane %v215, 4
    %v384 = vrot.slane %v216, 4
    %v389 = vrot.slane %v254, 4
    %v390 = vrot.slane %v255, 4
    %v391 = vrot.slane %v256, 4
    %v392 = vrot.slane %v257, 4
    %v397 = vrot.slane %v328, 4
    %v398 = vrot.slane %v329, 4
    %v399 = vrot.slane %v330, 4
    %v400 = vrot.slane %v331, 4
    %vm401 = vcmask 1043456
    %v404 = vsel %vm401, %v102, %v373
    %v408 = vsel %vm401, %v103, %v374
    %v412 = vsel %vm401, %v104, %v375
    %v416 = vsel %vm401, %v105, %v376
    %v420 = vsel %vm401, %v176, %v381
    %v424 = vsel %vm401, %v177, %v382
    %v428 = vsel %vm401, %v178, %v383
    %v432 = vsel %vm401, %v179, %v384
    %v436 = vsel %vm401, %v217, %v389
    %v440 = vsel %vm401, %v218, %v390
    %v444 = vsel %vm401, %v219, %v391
    %v448 = vsel %vm401, %v220, %v392
    %v452 = vsel %vm401, %v291, %v397
    %v456 = vsel %vm401, %v292, %v398
    %v460 = vsel %vm401, %v293, %v399
    %v464 = vsel %vm401, %v294, %v400
    %v466 = vld [vmem:[%s3] sm:$0xff]
    %468 = vset.pattern.permute.xlu0 0
    %469 = vperm.xlu0 %468, %v466
    %v470 = vpop.permute.xlu0 %469
    %vm472 = vcmask 588800
    %v474 = vsel %vm472, %v66, 0
    %v477 = vsel %vm401, %v365, 0
    %v480 = vsel %vm401, %v366, 0
    %v483 = vsel %vm401, %v367, 0
    %v486 = vsel %vm401, %v368, 0
    %488 = vmatprep.subr.bf16.mxu0 %v408
    %489 = vmatpush1.bf16.msra.mxu0 %v404
    %490 = vmatprep.subr.bf16.mxu0 %v424
    %491 = vmatpush1.bf16.msra.mxu0 %v420
    %492 = vmatprep.subr.bf16.mxu0 %v440
    %493 = vmatpush1.bf16.msra.mxu0 %v436
    %494 = vmatprep.subr.bf16.mxu0 %v456
    %495 = vmatpush1.bf16.msra.mxu0 %v452
    %496 = vmatprep.subr.bf16.mxu0 %v480
    %497 = vmatpush1.bf16.msra.mxu0 %v477
    %498 = vmatprep.subr.bf16.mxu0 0
    %499 = vmatpush1.bf16.msra.mxu0 0
    %500 = vmatprep.subr.bf16.mxu0 0
    %501 = vmatpush1.bf16.msra.mxu0 0
    %502 = vmatprep.subr.bf16.mxu0 0
    %503 = vmatpush1.bf16.msra.mxu0 0
    %504 = vmatprep.subr.bf16.mxu0 0
    %505 = vmatpush1.bf16.msra.mxu0 0
    %506 = vmatprep.subr.bf16.mxu0 0
    %507 = vmatpush1.bf16.msra.mxu0 0
    %508 = vmatprep.subr.bf16.mxu0 0
    %509 = vmatpush1.bf16.msra.mxu0 0
    %510 = vmatprep.subr.bf16.mxu0 0
    %511 = vmatpush1.bf16.msra.mxu0 0
    %512 = vmatprep.subr.bf16.mxu0 0
    %513 = vmatpush1.bf16.msra.mxu0 0
    %514 = vmatprep.subr.bf16.mxu0 0
    %515 = vmatpush1.bf16.msra.mxu0 0
    %516 = vmatprep.subr.bf16.mxu0 0
    %517 = vmatpush1.bf16.msra.mxu0 0
    %518 = vmatprep.subr.bf16.mxu0 0
    %519 = vmatpush1.bf16.msra.mxu0 0
    %520 = vmatprep.mubr.bf16.mxu0 0
    %521 = vmatmul.mubr.bf16.gmra.mrb[0].mxu0 %v474
    %v522 = vpop.f32.mrb[0].mxu0
    %v523 = vadd.f32 %v470, %v522
    %v524 = vpop.f32.mrb[0].mxu0
    %v525 = vadd.f32 %v470, %v524
    %v526 = vpop.f32.mrb[0].mxu0
    %v527 = vpop.f32.mrb[0].mxu0
    %528 = vdwg.mxu0
    %529 = vmatprep.subr.bf16.mxu0 %v416
    %530 = vmatpush1.bf16.msra.mxu0 %v412
    %531 = vmatprep.subr.bf16.mxu0 %v432
    %532 = vmatpush1.bf16.msra.mxu0 %v428
    %533 = vmatprep.subr.bf16.mxu0 %v448
    %534 = vmatpush1.bf16.msra.mxu0 %v444
    %535 = vmatprep.subr.bf16.mxu0 %v464
    %536 = vmatpush1.bf16.msra.mxu0 %v460
    %537 = vmatprep.subr.bf16.mxu0 %v486
    %538 = vmatpush1.bf16.msra.mxu0 %v483
    %539 = vmatprep.subr.bf16.mxu0 0
    %540 = vmatpush1.bf16.msra.mxu0 0
    %541 = vmatprep.subr.bf16.mxu0 0
    %542 = vmatpush1.bf16.msra.mxu0 0
    %543 = vmatprep.subr.bf16.mxu0 0
    %544 = vmatpush1.bf16.msra.mxu0 0
    %545 = vmatprep.subr.bf16.mxu0 0
    %546 = vmatpush1.bf16.msra.mxu0 0
    %547 = vmatprep.subr.bf16.mxu0 0
    %548 = vmatpush1.bf16.msra.mxu0 0
    %549 = vmatprep.subr.bf16.mxu0 0
    %550 = vmatpush1.bf16.msra.mxu0 0
    %551 = vmatprep.subr.bf16.mxu0 0
    %552 = vmatpush1.bf16.msra.mxu0 0
    %553 = vmatprep.subr.bf16.mxu0 0
    %554 = vmatpush1.bf16.msra.mxu0 0
    %555 = vmatprep.subr.bf16.mxu0 0
    %556 = vmatpush1.bf16.msra.mxu0 0
    %557 = vmatprep.subr.bf16.mxu0 0
    %558 = vmatpush1.bf16.msra.mxu0 0
    %559 = vmatprep.subr.bf16.mxu0 0
    %560 = vmatpush1.bf16.msra.mxu0 0
    %561 = vmatprep.mubr.bf16.mxu0 0
    %562 = vmatmul.mubr.bf16.gmra.mrb[0].mxu0 %v474
    %v563 = vpop.f32.mrb[0].mxu0
    %v564 = vadd.f32 %v470, %v563
    %v565 = vpop.f32.mrb[0].mxu0
    %v566 = vadd.f32 %v470, %v565
    %v567 = vpop.f32.mrb[0].mxu0
    %v568 = vpop.f32.mrb[0].mxu0
    %569 = vdwg.mxu0
    %v570 = vmax.f32 %v523, 0.0
    %v571 = vmax.f32 %v525, 0.0
    %v572 = vmax.f32 %v564, 0.0
    %v573 = vmax.f32 %v566, 0.0
    %v574 = vadd.f32 %v570, %v54
    %v575 = vadd.f32 %v571, %v55
    %v576 = vadd.f32 %v572, %v56
    %v577 = vadd.f32 %v573, %v57
    %v578 = vld [vmem:[%s4] sm:$0xf]
    %579 = vrot.lane.b32.xlu0 %v574, 17
    %v580 = vpop.permute.xlu0 %579
    %581 = vrot.lane.b32.xlu0 %v575, 17
    %v582 = vpop.permute.xlu0 %581
    %583 = vrot.lane.b32.xlu0 %v576, 17
    %v584 = vpop.permute.xlu0 %583
    %585 = vrot.lane.b32.xlu0 %v577, 17
    %v586 = vpop.permute.xlu0 %585
    %v587 = vsel %vm77, %v584, %v586
    %v588 = vsel %vm77, %v582, %v584
    %v589 = vsel %vm77, %v580, %v582
    %v590 = vsel %vm77, %v586, %v580
    %v591 = vmul.f32 %v590, %v85
    %v592 = vmul.f32 %v589, %v89
    %v593 = vmul.f32 %v588, %v93
    %v594 = vmul.f32 %v587, %v97
    %v595 = vpack.c.bf16 %v591, %v591
    %v596 = vpack.c.bf16 %v592, %v592
    %v597 = vpack.c.bf16 %v593, %v593
    %v598 = vpack.c.bf16 %v594, %v594
    %599 = vrot.lane.b32.xlu0 %v574, 16
    %v600 = vpop.permute.xlu0 %599
    %601 = vrot.lane.b32.xlu0 %v575, 16
    %v602 = vpop.permute.xlu0 %601
    %603 = vrot.lane.b32.xlu0 %v576, 16
    %v604 = vpop.permute.xlu0 %603
    %605 = vrot.lane.b32.xlu0 %v577, 16
    %v606 = vpop.permute.xlu0 %605
    %v607 = vsel %vm114, %v604, %v606
    %v608 = vsel %vm114, %v602, %v604
    %v609 = vsel %vm114, %v600, %v602
    %v610 = vsel %vm114, %v606, %v600
    %v611 = vmul.f32 %v610, %v122
    %v612 = vmul.f32 %v609, %v126
    %v613 = vmul.f32 %v608, %v130
    %v614 = vmul.f32 %v607, %v134
    %v615 = vpack.c.bf16 %v611, %v611
    %v616 = vpack.c.bf16 %v612, %v612
    %v617 = vpack.c.bf16 %v613, %v613
    %v618 = vpack.c.bf16 %v614, %v614
    %619 = vrot.lane.b32.xlu0 %v574, 15
    %v620 = vpop.permute.xlu0 %619
    %621 = vrot.lane.b32.xlu0 %v575, 15
    %v622 = vpop.permute.xlu0 %621
    %623 = vrot.lane.b32.xlu0 %v576, 15
    %v624 = vpop.permute.xlu0 %623
    %625 = vrot.lane.b32.xlu0 %v577, 15
    %v626 = vpop.permute.xlu0 %625
    %v627 = vsel %vm151, %v624, %v626
    %v628 = vsel %vm151, %v622, %v624
    %v629 = vsel %vm151, %v620, %v622
    %v630 = vsel %vm151, %v626, %v620
    %v631 = vmul.f32 %v630, %v159
    %v632 = vmul.f32 %v629, %v163
    %v633 = vmul.f32 %v628, %v167
    %v634 = vmul.f32 %v627, %v171
    %v635 = vpack.c.bf16 %v631, %v631
    %v636 = vpack.c.bf16 %v632, %v632
    %v637 = vpack.c.bf16 %v633, %v633
    %v638 = vpack.c.bf16 %v634, %v634
    %639 = vrot.lane.b32.xlu0 %v574, 1
    %v640 = vpop.permute.xlu0 %639
    %641 = vrot.lane.b32.xlu0 %v575, 1
    %v642 = vpop.permute.xlu0 %641
    %643 = vrot.lane.b32.xlu0 %v576, 1
    %v644 = vpop.permute.xlu0 %643
    %645 = vrot.lane.b32.xlu0 %v577, 1
    %v646 = vpop.permute.xlu0 %645
    %v647 = vsel %vm188, %v644, %v646
    %v648 = vsel %vm188, %v642, %v644
    %v649 = vsel %vm188, %v640, %v642
    %v650 = vsel %vm188, %v646, %v640
    %v651 = vmul.f32 %v650, %v196
    %v652 = vmul.f32 %v649, %v200
    %v653 = vmul.f32 %v648, %v204
    %v654 = vmul.f32 %v647, %v208
    %v655 = vpack.c.bf16 %v651, %v651
    %v656 = vpack.c.bf16 %v652, %v652
    %v657 = vpack.c.bf16 %v653, %v653
    %v658 = vpack.c.bf16 %v654, %v654
    %v659 = vpack.c.bf16 %v574, %v574
    %v660 = vpack.c.bf16 %v575, %v575
    %v661 = vpack.c.bf16 %v576, %v576
    %v662 = vpack.c.bf16 %v577, %v577
    %663 = vrot.lane.b32.xlu0 %v574, 127
    %v664 = vpop.permute.xlu0 %663
    %665 = vrot.lane.b32.xlu0 %v575, 127
    %v666 = vpop.permute.xlu0 %665
    %667 = vrot.lane.b32.xlu0 %v576, 127
    %v668 = vpop.permute.xlu0 %667
    %669 = vrot.lane.b32.xlu0 %v577, 127
    %v670 = vpop.permute.xlu0 %669
    %v671 = vsel %vm229, %v668, %v670
    %v672 = vsel %vm229, %v666, %v668
    %v673 = vsel %vm229, %v664, %v666
    %v674 = vsel %vm229, %v670, %v664
    %v675 = vmul.f32 %v673, %v237
    %v676 = vmul.f32 %v672, %v241
    %v677 = vmul.f32 %v671, %v245
    %v678 = vmul.f32 %v674, %v249
    %v679 = vpack.c.bf16 %v675, %v675
    %v680 = vpack.c.bf16 %v676, %v676
    %v681 = vpack.c.bf16 %v677, %v677
    %v682 = vpack.c.bf16 %v678, %v678
    %683 = vrot.lane.b32.xlu0 %v574, 113
    %v684 = vpop.permute.xlu0 %683
    %685 = vrot.lane.b32.xlu0 %v575, 113
    %v686 = vpop.permute.xlu0 %685
    %687 = vrot.lane.b32.xlu0 %v576, 113
    %v688 = vpop.permute.xlu0 %687
    %689 = vrot.lane.b32.xlu0 %v577, 113
    %v690 = vpop.permute.xlu0 %689
    %v691 = vsel %vm266, %v688, %v690
    %v692 = vsel %vm266, %v686, %v688
    %v693 = vsel %vm266, %v684, %v686
    %v694 = vsel %vm266, %v690, %v684
    %v695 = vmul.f32 %v693, %v274
    %v696 = vmul.f32 %v692, %v278
    %v697 = vmul.f32 %v691, %v282
    %v698 = vmul.f32 %v694, %v286
    %v699 = vpack.c.bf16 %v695, %v695
    %v700 = vpack.c.bf16 %v696, %v696
    %v701 = vpack.c.bf16 %v697, %v697
    %v702 = vpack.c.bf16 %v698, %v698
    %703 = vrot.lane.b32.xlu0 %v574, 112
    %v704 = vpop.permute.xlu0 %703
    %705 = vrot.lane.b32.xlu0 %v575, 112
    %v706 = vpop.permute.xlu0 %705
    %707 = vrot.lane.b32.xlu0 %v576, 112
    %v708 = vpop.permute.xlu0 %707
    %709 = vrot.lane.b32.xlu0 %v577, 112
    %v710 = vpop.permute.xlu0 %709
    %v711 = vsel %vm303, %v708, %v710
    %v712 = vsel %vm303, %v706, %v708
    %v713 = vsel %vm303, %v704, %v706
    %v714 = vsel %vm303, %v710, %v704
    %v715 = vmul.f32 %v713, %v311
    %v716 = vmul.f32 %v712, %v315
    %v717 = vmul.f32 %v711, %v319
    %v718 = vmul.f32 %v714, %v323
    %v719 = vpack.c.bf16 %v715, %v715
    %v720 = vpack.c.bf16 %v716, %v716
    %v721 = vpack.c.bf16 %v717, %v717
    %v722 = vpack.c.bf16 %v718, %v718
    %723 = vrot.lane.b32.xlu0 %v574, 111
    %v724 = vpop.permute.xlu0 %723
    %725 = vrot.lane.b32.xlu0 %v575, 111
    %v726 = vpop.permute.xlu0 %725
    %727 = vrot.lane.b32.xlu0 %v576, 111
    %v728 = vpop.permute.xlu0 %727
    %729 = vrot.lane.b32.xlu0 %v577, 111
    %v730 = vpop.permute.xlu0 %729
    %v731 = vsel %vm340, %v728, %v730
    %v732 = vsel %vm340, %v726, %v728
    %v733 = vsel %vm340, %v724, %v726
    %v734 = vsel %vm340, %v730, %v724
    %v735 = vmul.f32 %v733, %v348
    %v736 = vmul.f32 %v732, %v352
    %v737 = vmul.f32 %v731, %v356
    %v738 = vmul.f32 %v734, %v360
    %v739 = vpack.c.bf16 %v735, %v735
    %v740 = vpack.c.bf16 %v736, %v736
    %v741 = vpack.c.bf16 %v737, %v737
    %v742 = vpack.c.bf16 %v738, %v738
    %v747 = vrot.slane %v615, 4
    %v748 = vrot.slane %v616, 4
    %v749 = vrot.slane %v617, 4
    %v750 = vrot.slane %v618, 4
    %v755 = vrot.slane %v655, 4
    %v756 = vrot.slane %v656, 4
    %v757 = vrot.slane %v657, 4
    %v758 = vrot.slane %v658, 4
    %v763 = vrot.slane %v679, 4
    %v764 = vrot.slane %v680, 4
    %v765 = vrot.slane %v681, 4
    %v766 = vrot.slane %v682, 4
    %v771 = vrot.slane %v719, 4
    %v772 = vrot.slane %v720, 4
    %v773 = vrot.slane %v721, 4
    %v774 = vrot.slane %v722, 4
    %v777 = vsel %vm401, %v595, %v747
    %v781 = vsel %vm401, %v596, %v748
    %v785 = vsel %vm401, %v597, %v749
    %v789 = vsel %vm401, %v598, %v750
    %v793 = vsel %vm401, %v635, %v755
    %v797 = vsel %vm401, %v636, %v756
    %v801 = vsel %vm401, %v637, %v757
    %v805 = vsel %vm401, %v638, %v758
    %v809 = vsel %vm401, %v659, %v763
    %v813 = vsel %vm401, %v660, %v764
    %v817 = vsel %vm401, %v661, %v765
    %v821 = vsel %vm401, %v662, %v766
    %v825 = vsel %vm401, %v699, %v771
    %v829 = vsel %vm401, %v700, %v772
    %v833 = vsel %vm401, %v701, %v773
    %v837 = vsel %vm401, %v702, %v774
    %v839 = vld [vmem:[%s5] sm:$0xff]
    %841 = vset.pattern.permute.xlu0 0
    %842 = vperm.xlu0 %841, %v839
    %v843 = vpop.permute.xlu0 %842
    %v846 = vsel %vm472, %v578, 0
    %v849 = vsel %vm401, %v739, 0
    %v852 = vsel %vm401, %v740, 0
    %v855 = vsel %vm401, %v741, 0
    %v858 = vsel %vm401, %v742, 0
    %860 = vmatprep.subr.bf16.mxu0 %v781
    %861 = vmatpush1.bf16.msra.mxu0 %v777
    %862 = vmatprep.subr.bf16.mxu0 %v797
    %863 = vmatpush1.bf16.msra.mxu0 %v793
    %864 = vmatprep.subr.bf16.mxu0 %v813
    %865 = vmatpush1.bf16.msra.mxu0 %v809
    %866 = vmatprep.subr.bf16.mxu0 %v829
    %867 = vmatpush1.bf16.msra.mxu0 %v825
    %868 = vmatprep.subr.bf16.mxu0 %v852
    %869 = vmatpush1.bf16.msra.mxu0 %v849
    %870 = vmatprep.subr.bf16.mxu0 0
    %871 = vmatpush1.bf16.msra.mxu0 0
    %872 = vmatprep.subr.bf16.mxu0 0
    %873 = vmatpush1.bf16.msra.mxu0 0
    %874 = vmatprep.subr.bf16.mxu0 0
    %875 = vmatpush1.bf16.msra.mxu0 0
    %876 = vmatprep.subr.bf16.mxu0 0
    %877 = vmatpush1.bf16.msra.mxu0 0
    %878 = vmatprep.subr.bf16.mxu0 0
    %879 = vmatpush1.bf16.msra.mxu0 0
    %880 = vmatprep.subr.bf16.mxu0 0
    %881 = vmatpush1.bf16.msra.mxu0 0
    %882 = vmatprep.subr.bf16.mxu0 0
    %883 = vmatpush1.bf16.msra.mxu0 0
    %884 = vmatprep.subr.bf16.mxu0 0
    %885 = vmatpush1.bf16.msra.mxu0 0
    %886 = vmatprep.subr.bf16.mxu0 0
    %887 = vmatpush1.bf16.msra.mxu0 0
    %888 = vmatprep.subr.bf16.mxu0 0
    %889 = vmatpush1.bf16.msra.mxu0 0
    %890 = vmatprep.subr.bf16.mxu0 0
    %891 = vmatpush1.bf16.msra.mxu0 0
    %892 = vmatprep.mubr.bf16.mxu0 0
    %893 = vmatmul.mubr.bf16.gmra.mrb[0].mxu0 %v846
    %v894 = vpop.f32.mrb[0].mxu0
    %v895 = vadd.f32 %v843, %v894
    %v896 = vpop.f32.mrb[0].mxu0
    %v897 = vadd.f32 %v843, %v896
    %v898 = vpop.f32.mrb[0].mxu0
    %v899 = vpop.f32.mrb[0].mxu0
    %900 = vdwg.mxu0
    %901 = vmatprep.subr.bf16.mxu0 %v789
    %902 = vmatpush1.bf16.msra.mxu0 %v785
    %903 = vmatprep.subr.bf16.mxu0 %v805
    %904 = vmatpush1.bf16.msra.mxu0 %v801
    %905 = vmatprep.subr.bf16.mxu0 %v821
    %906 = vmatpush1.bf16.msra.mxu0 %v817
    %907 = vmatprep.subr.bf16.mxu0 %v837
    %908 = vmatpush1.bf16.msra.mxu0 %v833
    %909 = vmatprep.subr.bf16.mxu0 %v858
    %910 = vmatpush1.bf16.msra.mxu0 %v855
    %911 = vmatprep.subr.bf16.mxu0 0
    %912 = vmatpush1.bf16.msra.mxu0 0
    %913 = vmatprep.subr.bf16.mxu0 0
    %914 = vmatpush1.bf16.msra.mxu0 0
    %915 = vmatprep.subr.bf16.mxu0 0
    %916 = vmatpush1.bf16.msra.mxu0 0
    %917 = vmatprep.subr.bf16.mxu0 0
    %918 = vmatpush1.bf16.msra.mxu0 0
    %919 = vmatprep.subr.bf16.mxu0 0
    %920 = vmatpush1.bf16.msra.mxu0 0
    %921 = vmatprep.subr.bf16.mxu0 0
    %922 = vmatpush1.bf16.msra.mxu0 0
    %923 = vmatprep.subr.bf16.mxu0 0
    %924 = vmatpush1.bf16.msra.mxu0 0
    %925 = vmatprep.subr.bf16.mxu0 0
    %926 = vmatpush1.bf16.msra.mxu0 0
    %927 = vmatprep.subr.bf16.mxu0 0
    %928 = vmatpush1.bf16.msra.mxu0 0
    %929 = vmatprep.subr.bf16.mxu0 0
    %930 = vmatpush1.bf16.msra.mxu0 0
    %931 = vmatprep.subr.bf16.mxu0 0
    %932 = vmatpush1.bf16.msra.mxu0 0
    %933 = vmatprep.mubr.bf16.mxu0 0
    %934 = vmatmul.mubr.bf16.gmra.mrb[0].mxu0 %v846
    %v935 = vpop.f32.mrb[0].mxu0
    %v936 = vadd.f32 %v843, %v935
    %v937 = vpop.f32.mrb[0].mxu0
    %v938 = vadd.f32 %v843, %v937
    %v939 = vpop.f32.mrb[0].mxu0
    %v940 = vpop.f32.mrb[0].mxu0
    %941 = vdwg.mxu0
    %v942 = vmax.f32 %v895, 0.0
    %v943 = vmax.f32 %v897, 0.0
    %v944 = vmax.f32 %v936, 0.0
    %v945 = vmax.f32 %v938, 0.0
    %v950 = vcombine.low %v942, %v943
    %v951 = vcombine.low %v944, %v945
    %954 = vst [vmem:[#allocation7] sm:$0xff] %v950
    %955 = vst [vmem:[#allocation7 + $0x8] sm:$0xff] %v951
    %v956 = vcombine.high %v942, %v943
    %v957 = vcombine.high %v944, %v945
    %960 = vst [vmem:[#allocation8] sm:$0xff] %v956
    %961 = vst [vmem:[#allocation8 + $0x8] sm:$0xff] %v957
    // Predicated region
    $region34: #{tpu_custom_call.1} parent=1 // pred_check
      _
    $region35: #{tpu_custom_call.1} parent=1 // pred_check_branch
      %963 = sbr.rel (0) target = $region37
    $region36: #{tpu_custom_call.1} parent=1 // pred_region
      %s965 = ssub.s32 256, 256
      %966 = vsyncadd [#allocation4], %s965
      %s968 = sshll.u32 [#allocation7], 4
      %s969 = int_to_ptr.vmem [resolvable:$true] %s968
      %971 = dma.vmem_to_hbm [thread:$0]  %s969, 256, %s6, [#allocation4]
    $region37: #{tpu_custom_call.1} parent=1 // pred_fallthru
      _
    // Predicated region
    $region38: #{tpu_custom_call.1} parent=1 // pred_check
      _
    $region39: #{tpu_custom_call.1} parent=1 // pred_check_branch
      %973 = sbr.rel (0) target = $region41
    $region40: #{tpu_custom_call.1} parent=1 // pred_region
      %s975 = ssub.s32 256, 256
      %976 = vsyncadd [#allocation9], %s975
      %s978 = sshll.u32 [#allocation8], 4
      %s979 = int_to_ptr.vmem [resolvable:$true] %s978
      %981 = dma.vmem_to_hbm [thread:$0]  %s979, 256, %s7, [#allocation9]
    $region41: #{tpu_custom_call.1} parent=1 // pred_fallthru
      _
    // Predicated region
    $region42: #{tpu_custom_call.1} parent=1 // pred_check
      _
    $region43: #{tpu_custom_call.1} parent=1 // pred_check_branch
      %983 = sbr.rel (0) target = $region45
    $region44: #{tpu_custom_call.1} parent=1 // pred_region
      %984 = dma.done [#allocation4], 256
    $region45: #{tpu_custom_call.1} parent=1 // pred_fallthru
      _
    // Predicated region
    $region46: #{tpu_custom_call.1} parent=1 // pred_check
      _
    $region47: #{tpu_custom_call.1} parent=1 // pred_check_branch
      %986 = sbr.rel (0) target = $region49
    $region48: #{tpu_custom_call.1} parent=1 // pred_region
      %987 = dma.done [#allocation9], 256
    $region49: #{tpu_custom_call.1} parent=1 // pred_fallthru
      _
    %988 = vsyncpa [#allocation3], 1
    %989 = vsyncpa [#allocation6], 1
    %990 = vsyncpa [#allocation4], 1
    %991 = vsyncpa [#allocation9], 1

</llo_original>
